<compile_context>
chip_gen: v5e
topology: v5e:2x2
jax: 0.10.0
libtpu: 0.0.40
codegen_flags: <defaults>
</compile_context>

<pallas_src>
import numpy as np
import jax
import jax.numpy as jnp
from jax.experimental import pallas as pl
from jax.experimental.pallas import tpu as pltpu

_TR_MAX = 1024   # max sublane rows per grid step (=> up to 131072 anchors / step)
_NACC = 10       # number of accumulated per-anchor quantities


def _round_up(x, m):
    return ((x + m - 1) // m) * m


def _loss_kernel(out_ref, lab_ref, res_ref, acc_ref):
    i = pl.program_id(0)

    @pl.when(i == 0)
    def _init():
        acc_ref[...] = jnp.zeros_like(acc_ref)

    o = out_ref[...].astype(jnp.float32)   # (5, TR, 128): ch 0 = cls logit, 1..4 = regression
    l = lab_ref[...].astype(jnp.float32)   # (5, TR, 128)

    lab0 = l[0]                                        # (TR, 128) classification target
    pos_m = (lab0 > 0.5).astype(jnp.float32)           # labels[:, 0] >  0.5
    neg_m = (lab0 < -0.5).astype(jnp.float32)          # labels[:, 0] < -0.5

    # BCE in logit space:  log p     = -softplus(-x) = -(max(-x,0) + log1p(exp(-|x|)))
    #                      log (1-p) = -softplus( x) = -(max( x,0) + log1p(exp(-|x|)))
    # nn.BCELoss clamps each log term at -100 -> clamp the softplus terms at 100.
    x = o[0]
    sp = jnp.log1p(jnp.exp(-jnp.abs(x)))
    logp = -jnp.minimum(jnp.maximum(-x, 0.0) + sp, 100.0)
    log1mp = -jnp.minimum(jnp.maximum(x, 0.0) + sp, 100.0)

    pos_bce = -(lab0 * logp + (1.0 - lab0) * log1mp)    # target = labels[:, 0]
    neg_t = lab0 + 1.0
    neg_bce = -(neg_t * logp + (1.0 - neg_t) * log1mp)  # target = labels[:, 0] + 1

    # SmoothL1 (beta=1) on the 4 regression channels, positives only.
    d = o[1:5] - l[1:5]                                 # (4, TR, 128)
    ad = jnp.abs(d)
    sl = jnp.where(ad < 1.0, 0.5 * d * d, ad - 0.5) * pos_m

    pred_pos = (x >= 0.0).astype(jnp.float32)           # sigmoid(x) >= 0.5

    # Grouped slice updates straight into the persistent accumulator (no concat temp).
    acc_ref[0] += pos_bce * pos_m              # pos BCE sum
    acc_ref[1] += neg_bce * neg_m              # neg BCE sum
    acc_ref[2:6] += sl                         # SmoothL1 sums (z, h, w, d)
    acc_ref[6] += pos_m                        # pos count
    acc_ref[7] += neg_m                        # neg count
    acc_ref[8] += pred_pos * pos_m             # pos correct
    acc_ref[9] += (1.0 - pred_pos) * neg_m     # neg correct

    # One cross-lane/sublane reduction and one lane-dense store, on the last tile only.
    @pl.when(i == pl.num_programs(0) - 1)
    def _finalize():
        lane_tot = jnp.sum(acc_ref[...], axis=1)             # (10, 128) sum rows
        totals = jnp.sum(lane_tot, axis=1, keepdims=True)    # (10, 1)   sum lanes
        res_ref[...] = jnp.broadcast_to(totals, res_ref.shape)


def loss_forward(output, labels, num_hard=0, train=True):
    """Mirrors Loss.forward with num_hard=0 (default). Returns JAX scalars (jittable)."""
    if num_hard > 0 and train:
        # TODO(synk): hard-negative mining (dynamic top-k) not supported in the Pallas port.
        raise NotImplementedError("num_hard > 0 is not supported")

    def _flat(x):
        x2 = x.reshape(-1, 5)
        if x2.dtype != jnp.bfloat16 and x2.dtype != jnp.float32:
            x2 = x2.astype(jnp.float32)   # keep bf16 inputs bf16 (upcast per-tile in-kernel)
        return x2

    out2 = _flat(output)
    lab2 = _flat(labels)
    n = out2.shape[0]

    # Dense 3-D layout: (5, rows_total, 128).  Pick the tile count first, then round the
    # per-tile row count up to a multiple of 16 (bf16-safe sublane tiling), so padding is
    # at most ~tiles*16 rows rather than a whole max-size tile.
    rows_needed = -(-n // 128)
    tiles = max(1, -(-rows_needed // _TR_MAX))
    tr = _round_up(-(-rows_needed // tiles), 16)
    rows_total = tiles * tr
    lanes_total = rows_total * 128

    def _slab(x2):
        return jnp.pad(x2.T, ((0, 0), (0, lanes_total - n))).reshape(5, rows_total, 128)

    in_spec = pl.BlockSpec((5, tr, 128), lambda i: (0, i, 0))

    partial = pl.pallas_call(
        _loss_kernel,
        out_shape=jax.ShapeDtypeStruct((_NACC, 128), jnp.float32),
        grid_spec=pltpu.PrefetchScalarGridSpec(
            num_scalar_prefetch=0,
            grid=(tiles,),
            in_specs=[in_spec, in_spec],
            out_specs=pl.BlockSpec((_NACC, 128), lambda i: (0, 0)),
            scratch_shapes=[pltpu.VMEM((_NACC, tr, 128), jnp.float32)],
        ),
        compiler_params=pltpu.CompilerParams(
            dimension_semantics=("arbitrary",),
            vmem_limit_bytes=32 * 1024 * 1024),
    )(_slab(out2), _slab(lab2))

    totals = partial[:, 0]                               # (10,)
    pos_bce_s, neg_bce_s = totals[0], totals[1]
    sl_sums = totals[2:6]
    pos_cnt, neg_cnt, pos_cor, neg_cor = totals[6], totals[7], totals[8], totals[9]

    has_pos = pos_cnt > 0
    pos_bce_mean = pos_bce_s / jnp.maximum(pos_cnt, 1.0)
    neg_bce_mean = neg_bce_s / jnp.maximum(neg_cnt, 1.0)
    regress = jnp.where(has_pos, sl_sums / jnp.maximum(pos_cnt, 1.0), 0.0)
    classify = jnp.where(has_pos,
                         0.5 * pos_bce_mean + 0.5 * neg_bce_mean,
                         0.5 * neg_bce_mean)
    loss = classify + jnp.sum(regress)

    return [loss, classify,
            regress[0], regress[1], regress[2], regress[3],
            pos_cor.astype(jnp.int32), pos_cnt.astype(jnp.int32),
            neg_cor.astype(jnp.int32), neg_cnt.astype(jnp.int32)]


def _numpy_reference(output, labels):
    o = np.asarray(output, np.float32).reshape(-1, 5)
    l = np.asarray(labels, np.float32).reshape(-1, 5)
    pos = l[:, 0] > 0.5
    neg = l[:, 0] < -0.5
    sig = lambda x: 1.0 / (1.0 + np.exp(-x))

    def bce(p, t):
        return float(np.mean(-(t * np.maximum(np.log(p), -100.0)
                               + (1 - t) * np.maximum(np.log(1 - p), -100.0))))

    def sl1(x, t):
        d = x - t
        ad = np.abs(d)
        return float(np.mean(np.where(ad < 1.0, 0.5 * d * d, ad - 0.5)))

    nprob = sig(o[neg, 0])
    if pos.sum() > 0:
        po, plab = o[pos], l[pos]
        pprob = sig(po[:, 0])
        reg = [sl1(po[:, k + 1], plab[:, k + 1]) for k in range(4)]
        cls = 0.5 * bce(pprob, plab[:, 0]) + 0.5 * bce(nprob, l[neg, 0] + 1.0)
        pc, pt = int((pprob >= 0.5).sum()), int(pos.sum())
    else:
        reg = [0.0, 0.0, 0.0, 0.0]
        cls = 0.5 * bce(nprob, l[neg, 0] + 1.0)
        pc, pt = 0, 0
    loss = cls + sum(reg)
    nc, nt = int((nprob < 0.5).sum()), int(neg.sum())
    return [loss, cls] + reg + [pc, pt, nc, nt]


if __name__ == "__main__":
    key = jax.random.PRNGKey(0)
    k1, k2, k3 = jax.random.split(key, 3)

    # (batch, D, H, W, anchors, 5) detector head output and labels.
    shape = (2, 4, 4, 4, 3, 5)
    N = 2 * 4 * 4 * 4 * 3

    output = jax.random.normal(k1, shape, jnp.float32)
    cls = jax.random.choice(k2, jnp.array([1.0, -1.0, 0.0], jnp.float32),
                            shape=(N,), p=jnp.array([0.15, 0.7, 0.15]))
    # guarantee both positive and negative anchors exist
    cls = cls.at[:4].set(1.0).at[4:8].set(-1.0)
    lab_reg = jax.random.normal(k3, (2, 4, 4, 4, 3, 4), jnp.float32)
    labels = jnp.concatenate([cls.reshape(2, 4, 4, 4, 3, 1), lab_reg], axis=-1)

    res = jax.jit(loss_forward)(output, labels)
    jax.block_until_ready(res)

    ref = _numpy_reference(output, labels)
    np.testing.assert_allclose(float(res[0]), ref[0], rtol=1e-3, atol=1e-3)
    np.testing.assert_allclose(np.array([float(x) for x in res[1:6]], np.float32),
                               np.array(ref[1:6], np.float32), rtol=1e-3, atol=1e-3)
    got_counts = [int(x) for x in res[6:]]
    assert got_counts == ref[6:], (got_counts, ref[6:])

    print("KERNEL_OK")
</pallas_src>

<mosaic_0001>
module attributes {stable_mosaic.version = 11 : i64} {
  func.func @_loss_kernel(%arg0: i32, %arg1: memref<5x16x128xf32, #tpu.memory_space<vmem>>, %arg2: memref<5x16x128xf32, #tpu.memory_space<vmem>>, %arg3: memref<10x128xf32, #tpu.memory_space<vmem>>, %arg4: memref<10x16x128xf32, #tpu.memory_space<vmem>>) attributes {dimension_semantics = [#tpu.dimension_semantics<arbitrary>], iteration_bounds = array<i64: 1>, scalar_prefetch = 0 : i64, scratch_operands = 1 : i64, tpu.core_type = #tpu.core_type<tc>, window_params = [{transform_indices = @transform_0, window_bounds = array<i64: 5, 16, 128>}, {transform_indices = @transform_1, window_bounds = array<i64: 5, 16, 128>}, {pipeline_mode = #tpu.pipeline_mode<synchronous>, transform_indices = @transform_2, window_bounds = array<i64: 10, 128>}]} {
    %c0_i32 = arith.constant 0 : i32
    %0 = arith.cmpi eq, %arg0, %c0_i32 : i32
    %1 = arith.extui %0 : i1 to i32
    %c0_i32_0 = arith.constant 0 : i32
    %2 = arith.cmpi ne, %1, %c0_i32_0 : i32
    scf.if %2 {
      %cst_63 = arith.constant 0.000000e+00 : f32
      %121 = vector.broadcast %cst_63 : f32 to vector<10x16x128xf32>
      %c0_64 = arith.constant 0 : index
      %c0_65 = arith.constant 0 : index
      %c0_66 = arith.constant 0 : index
      %122 = vector.load %arg4[%c0_64, %c0_65, %c0_66] : memref<10x16x128xf32, #tpu.memory_space<vmem>>, vector<10x16x128xf32>
      tpu.vector_store %arg4[%c0_64, %c0_65, %c0_66], %121 {strides = array<i32>} : memref<10x16x128xf32, #tpu.memory_space<vmem>>, vector<10x16x128xf32>,
    } else {
    }
    %c0 = arith.constant 0 : index
    %c0_1 = arith.constant 0 : index
    %c0_2 = arith.constant 0 : index
    %3 = vector.load %arg1[%c0, %c0_1, %c0_2] : memref<5x16x128xf32, #tpu.memory_space<vmem>>, vector<5x16x128xf32>
    %c0_3 = arith.constant 0 : index
    %c0_4 = arith.constant 0 : index
    %c0_5 = arith.constant 0 : index
    %4 = vector.load %arg2[%c0_3, %c0_4, %c0_5] : memref<5x16x128xf32, #tpu.memory_space<vmem>>, vector<5x16x128xf32>
    %5 = vector.extract_strided_slice %4 {offsets = [0, 0, 0], sizes = [1, 16, 128], strides = [1, 1, 1]} : vector<5x16x128xf32> to vector<1x16x128xf32>
    %6 = vector.shape_cast %5 : vector<1x16x128xf32> to vector<16x128xf32>
    %cst = arith.constant 5.000000e-01 : f32
    %7 = vector.broadcast %cst : f32 to vector<16x128xf32>
    %8 = arith.cmpf ogt, %6, %7 : vector<16x128xf32>
    %9 = arith.extui %8 : vector<16x128xi1> to vector<16x128xi32>
    %10 = arith.sitofp %9 : vector<16x128xi32> to vector<16x128xf32>
    %cst_6 = arith.constant -5.000000e-01 : f32
    %11 = vector.broadcast %cst_6 : f32 to vector<16x128xf32>
    %12 = arith.cmpf olt, %6, %11 : vector<16x128xf32>
    %13 = arith.extui %12 : vector<16x128xi1> to vector<16x128xi32>
    %14 = arith.sitofp %13 : vector<16x128xi32> to vector<16x128xf32>
    %15 = vector.extract_strided_slice %3 {offsets = [0, 0, 0], sizes = [1, 16, 128], strides = [1, 1, 1]} : vector<5x16x128xf32> to vector<1x16x128xf32>
    %16 = vector.shape_cast %15 : vector<1x16x128xf32> to vector<16x128xf32>
    %17 = math.absf %16 : vector<16x128xf32>
    %cst_7 = arith.constant 0.000000e+00 : f32
    %18 = vector.broadcast %cst_7 : f32 to vector<16x128xf32>
    %19 = arith.subf %18, %17 : vector<16x128xf32>
    %20 = math.exp %19 : vector<16x128xf32>
    %21 = math.log1p %20 : vector<16x128xf32>
    %cst_8 = arith.constant 0.000000e+00 : f32
    %22 = vector.broadcast %cst_8 : f32 to vector<16x128xf32>
    %23 = arith.subf %22, %16 : vector<16x128xf32>
    %cst_9 = arith.constant 0.000000e+00 : f32
    %24 = vector.broadcast %cst_9 : f32 to vector<16x128xf32>
    %25 = arith.maximumf %23, %24 : vector<16x128xf32>
    %26 = arith.addf %25, %21 : vector<16x128xf32>
    %cst_10 = arith.constant 1.000000e+02 : f32
    %27 = vector.broadcast %cst_10 : f32 to vector<16x128xf32>
    %28 = arith.minimumf %26, %27 : vector<16x128xf32>
    %cst_11 = arith.constant 0.000000e+00 : f32
    %29 = vector.broadcast %cst_11 : f32 to vector<16x128xf32>
    %30 = arith.subf %29, %28 : vector<16x128xf32>
    %cst_12 = arith.constant 0.000000e+00 : f32
    %31 = vector.broadcast %cst_12 : f32 to vector<16x128xf32>
    %32 = arith.maximumf %16, %31 : vector<16x128xf32>
    %33 = arith.addf %32, %21 : vector<16x128xf32>
    %cst_13 = arith.constant 1.000000e+02 : f32
    %34 = vector.broadcast %cst_13 : f32 to vector<16x128xf32>
    %35 = arith.minimumf %33, %34 : vector<16x128xf32>
    %cst_14 = arith.constant 0.000000e+00 : f32
    %36 = vector.broadcast %cst_14 : f32 to vector<16x128xf32>
    %37 = arith.subf %36, %35 : vector<16x128xf32>
    %38 = arith.mulf %6, %30 : vector<16x128xf32>
    %cst_15 = arith.constant 1.000000e+00 : f32
    %39 = vector.broadcast %cst_15 : f32 to vector<16x128xf32>
    %40 = arith.subf %39, %6 : vector<16x128xf32>
    %41 = arith.mulf %40, %37 : vector<16x128xf32>
    %42 = arith.addf %38, %41 : vector<16x128xf32>
    %cst_16 = arith.constant 0.000000e+00 : f32
    %43 = vector.broadcast %cst_16 : f32 to vector<16x128xf32>
    %44 = arith.subf %43, %42 : vector<16x128xf32>
    %cst_17 = arith.constant 1.000000e+00 : f32
    %45 = vector.broadcast %cst_17 : f32 to vector<16x128xf32>
    %46 = arith.addf %6, %45 : vector<16x128xf32>
    %47 = arith.mulf %46, %30 : vector<16x128xf32>
    %cst_18 = arith.constant 1.000000e+00 : f32
    %48 = vector.broadcast %cst_18 : f32 to vector<16x128xf32>
    %49 = arith.subf %48, %46 : vector<16x128xf32>
    %50 = arith.mulf %49, %37 : vector<16x128xf32>
    %51 = arith.addf %47, %50 : vector<16x128xf32>
    %cst_19 = arith.constant 0.000000e+00 : f32
    %52 = vector.broadcast %cst_19 : f32 to vector<16x128xf32>
    %53 = arith.subf %52, %51 : vector<16x128xf32>
    %54 = vector.extract_strided_slice %3 {offsets = [1, 0, 0], sizes = [4, 16, 128], strides = [1, 1, 1]} : vector<5x16x128xf32> to vector<4x16x128xf32>
    %55 = vector.extract_strided_slice %4 {offsets = [1, 0, 0], sizes = [4, 16, 128], strides = [1, 1, 1]} : vector<5x16x128xf32> to vector<4x16x128xf32>
    %56 = arith.subf %54, %55 : vector<4x16x128xf32>
    %57 = math.absf %56 : vector<4x16x128xf32>
    %cst_20 = arith.constant 1.000000e+00 : f32
    %58 = vector.broadcast %cst_20 : f32 to vector<4x16x128xf32>
    %59 = arith.cmpf olt, %57, %58 : vector<4x16x128xf32>
    %cst_21 = arith.constant 5.000000e-01 : f32
    %60 = vector.broadcast %cst_21 : f32 to vector<4x16x128xf32>
    %61 = arith.mulf %60, %56 : vector<4x16x128xf32>
    %62 = arith.mulf %61, %56 : vector<4x16x128xf32>
    %cst_22 = arith.constant 5.000000e-01 : f32
    %63 = vector.broadcast %cst_22 : f32 to vector<4x16x128xf32>
    %64 = arith.subf %57, %63 : vector<4x16x128xf32>
    %65 = arith.select %59, %62, %64 : vector<4x16x128xi1>, vector<4x16x128xf32>
    %66 = vector.shape_cast %10 : vector<16x128xf32> to vector<1x16x128xf32>
    %67 = vector.broadcast %66 : vector<1x16x128xf32> to vector<4x16x128xf32>
    %68 = arith.mulf %65, %67 : vector<4x16x128xf32>
    %cst_23 = arith.constant 0.000000e+00 : f32
    %69 = vector.broadcast %cst_23 : f32 to vector<16x128xf32>
    %70 = arith.cmpf oge, %16, %69 : vector<16x128xf32>
    %71 = arith.extui %70 : vector<16x128xi1> to vector<16x128xi32>
    %72 = arith.sitofp %71 : vector<16x128xi32> to vector<16x128xf32>
    %c0_24 = arith.constant 0 : index
    %c0_25 = arith.constant 0 : index
    %c0_26 = arith.constant 0 : index
    %73 = vector.load %arg4[%c0_24, %c0_25, %c0_26] : memref<10x16x128xf32, #tpu.memory_space<vmem>>, vector<1x16x128xf32>
    %74 = vector.shape_cast %73 : vector<1x16x128xf32> to vector<16x128xf32>
    %75 = arith.mulf %44, %10 : vector<16x128xf32>
    %76 = arith.addf %74, %75 : vector<16x128xf32>
    %c0_27 = arith.constant 0 : index
    %c0_28 = arith.constant 0 : index
    %c0_29 = arith.constant 0 : index
    %77 = vector.load %arg4[%c0_27, %c0_28, %c0_29] : memref<10x16x128xf32, #tpu.memory_space<vmem>>, vector<1x16x128xf32>
    %78 = vector.shape_cast %77 : vector<1x16x128xf32> to vector<16x128xf32>
    %79 = vector.shape_cast %76 : vector<16x128xf32> to vector<1x16x128xf32>
    tpu.vector_store %arg4[%c0_27, %c0_28, %c0_29], %79 {strides = array<i32>} : memref<10x16x128xf32, #tpu.memory_space<vmem>>, vector<1x16x128xf32>,
    %c1 = arith.constant 1 : index
    %c0_30 = arith.constant 0 : index
    %c0_31 = arith.constant 0 : index
    %80 = vector.load %arg4[%c1, %c0_30, %c0_31] : memref<10x16x128xf32, #tpu.memory_space<vmem>>, vector<1x16x128xf32>
    %81 = vector.shape_cast %80 : vector<1x16x128xf32> to vector<16x128xf32>
    %82 = arith.mulf %53, %14 : vector<16x128xf32>
    %83 = arith.addf %81, %82 : vector<16x128xf32>
    %c1_32 = arith.constant 1 : index
    %c0_33 = arith.constant 0 : index
    %c0_34 = arith.constant 0 : index
    %84 = vector.load %arg4[%c1_32, %c0_33, %c0_34] : memref<10x16x128xf32, #tpu.memory_space<vmem>>, vector<1x16x128xf32>
    %85 = vector.shape_cast %84 : vector<1x16x128xf32> to vector<16x128xf32>
    %86 = vector.shape_cast %83 : vector<16x128xf32> to vector<1x16x128xf32>
    tpu.vector_store %arg4[%c1_32, %c0_33, %c0_34], %86 {strides = array<i32>} : memref<10x16x128xf32, #tpu.memory_space<vmem>>, vector<1x16x128xf32>,
    %c2 = arith.constant 2 : index
    %c0_35 = arith.constant 0 : index
    %c0_36 = arith.constant 0 : index
    %87 = vector.load %arg4[%c2, %c0_35, %c0_36] : memref<10x16x128xf32, #tpu.memory_space<vmem>>, vector<4x16x128xf32>
    %88 = arith.addf %87, %68 : vector<4x16x128xf32>
    %c2_37 = arith.constant 2 : index
    %c0_38 = arith.constant 0 : index
    %c0_39 = arith.constant 0 : index
    %89 = vector.load %arg4[%c2_37, %c0_38, %c0_39] : memref<10x16x128xf32, #tpu.memory_space<vmem>>, vector<4x16x128xf32>
    tpu.vector_store %arg4[%c2_37, %c0_38, %c0_39], %88 {strides = array<i32>} : memref<10x16x128xf32, #tpu.memory_space<vmem>>, vector<4x16x128xf32>,
    %c6 = arith.constant 6 : index
    %c0_40 = arith.constant 0 : index
    %c0_41 = arith.constant 0 : index
    %90 = vector.load %arg4[%c6, %c0_40, %c0_41] : memref<10x16x128xf32, #tpu.memory_space<vmem>>, vector<1x16x128xf32>
    %91 = vector.shape_cast %90 : vector<1x16x128xf32> to vector<16x128xf32>
    %92 = arith.addf %91, %10 : vector<16x128xf32>
    %c6_42 = arith.constant 6 : index
    %c0_43 = arith.constant 0 : index
    %c0_44 = arith.constant 0 : index
    %93 = vector.load %arg4[%c6_42, %c0_43, %c0_44] : memref<10x16x128xf32, #tpu.memory_space<vmem>>, vector<1x16x128xf32>
    %94 = vector.shape_cast %93 : vector<1x16x128xf32> to vector<16x128xf32>
    %95 = vector.shape_cast %92 : vector<16x128xf32> to vector<1x16x128xf32>
    tpu.vector_store %arg4[%c6_42, %c0_43, %c0_44], %95 {strides = array<i32>} : memref<10x16x128xf32, #tpu.memory_space<vmem>>, vector<1x16x128xf32>,
    %c7 = arith.constant 7 : index
    %c0_45 = arith.constant 0 : index
    %c0_46 = arith.constant 0 : index
    %96 = vector.load %arg4[%c7, %c0_45, %c0_46] : memref<10x16x128xf32, #tpu.memory_space<vmem>>, vector<1x16x128xf32>
    %97 = vector.shape_cast %96 : vector<1x16x128xf32> to vector<16x128xf32>
    %98 = arith.addf %97, %14 : vector<16x128xf32>
    %c7_47 = arith.constant 7 : index
    %c0_48 = arith.constant 0 : index
    %c0_49 = arith.constant 0 : index
    %99 = vector.load %arg4[%c7_47, %c0_48, %c0_49] : memref<10x16x128xf32, #tpu.memory_space<vmem>>, vector<1x16x128xf32>
    %100 = vector.shape_cast %99 : vector<1x16x128xf32> to vector<16x128xf32>
    %101 = vector.shape_cast %98 : vector<16x128xf32> to vector<1x16x128xf32>
    tpu.vector_store %arg4[%c7_47, %c0_48, %c0_49], %101 {strides = array<i32>} : memref<10x16x128xf32, #tpu.memory_space<vmem>>, vector<1x16x128xf32>,
    %c8 = arith.constant 8 : index
    %c0_50 = arith.constant 0 : index
    %c0_51 = arith.constant 0 : index
    %102 = vector.load %arg4[%c8, %c0_50, %c0_51] : memref<10x16x128xf32, #tpu.memory_space<vmem>>, vector<1x16x128xf32>
    %103 = vector.shape_cast %102 : vector<1x16x128xf32> to vector<16x128xf32>
    %104 = arith.mulf %72, %10 : vector<16x128xf32>
    %105 = arith.addf %103, %104 : vector<16x128xf32>
    %c8_52 = arith.constant 8 : index
    %c0_53 = arith.constant 0 : index
    %c0_54 = arith.constant 0 : index
    %106 = vector.load %arg4[%c8_52, %c0_53, %c0_54] : memref<10x16x128xf32, #tpu.memory_space<vmem>>, vector<1x16x128xf32>
    %107 = vector.shape_cast %106 : vector<1x16x128xf32> to vector<16x128xf32>
    %108 = vector.shape_cast %105 : vector<16x128xf32> to vector<1x16x128xf32>
    tpu.vector_store %arg4[%c8_52, %c0_53, %c0_54], %108 {strides = array<i32>} : memref<10x16x128xf32, #tpu.memory_space<vmem>>, vector<1x16x128xf32>,
    %c9 = arith.constant 9 : index
    %c0_55 = arith.constant 0 : index
    %c0_56 = arith.constant 0 : index
    %109 = vector.load %arg4[%c9, %c0_55, %c0_56] : memref<10x16x128xf32, #tpu.memory_space<vmem>>, vector<1x16x128xf32>
    %110 = vector.shape_cast %109 : vector<1x16x128xf32> to vector<16x128xf32>
    %cst_57 = arith.constant 1.000000e+00 : f32
    %111 = vector.broadcast %cst_57 : f32 to vector<16x128xf32>
    %112 = arith.subf %111, %72 : vector<16x128xf32>
    %113 = arith.mulf %112, %14 : vector<16x128xf32>
    %114 = arith.addf %110, %113 : vector<16x128xf32>
    %c9_58 = arith.constant 9 : index
    %c0_59 = arith.constant 0 : index
    %c0_60 = arith.constant 0 : index
    %115 = vector.load %arg4[%c9_58, %c0_59, %c0_60] : memref<10x16x128xf32, #tpu.memory_space<vmem>>, vector<1x16x128xf32>
    %116 = vector.shape_cast %115 : vector<1x16x128xf32> to vector<16x128xf32>
    %117 = vector.shape_cast %114 : vector<16x128xf32> to vector<1x16x128xf32>
    tpu.vector_store %arg4[%c9_58, %c0_59, %c0_60], %117 {strides = array<i32>} : memref<10x16x128xf32, #tpu.memory_space<vmem>>, vector<1x16x128xf32>,
    %c0_i32_61 = arith.constant 0 : i32
    %118 = arith.cmpi eq, %arg0, %c0_i32_61 : i32
    %119 = arith.extui %118 : i1 to i32
    %c0_i32_62 = arith.constant 0 : i32
    %120 = arith.cmpi ne, %119, %c0_i32_62 : i32
    scf.if %120 {
      %c0_63 = arith.constant 0 : index
      %c0_64 = arith.constant 0 : index
      %c0_65 = arith.constant 0 : index
      %121 = vector.load %arg4[%c0_63, %c0_64, %c0_65] : memref<10x16x128xf32, #tpu.memory_space<vmem>>, vector<10x16x128xf32>
      %cst_66 = arith.constant dense<0.000000e+00> : vector<10x128xf32>
      %122 = vector.multi_reduction <add>, %121, %cst_66 [1] : vector<10x16x128xf32> to vector<10x128xf32>
      %cst_67 = arith.constant dense<0.000000e+00> : vector<10xf32>
      %123 = vector.multi_reduction <add>, %122, %cst_67 [1] : vector<10x128xf32> to vector<10xf32>
      %124 = vector.shape_cast %123 : vector<10xf32> to vector<10x1xf32>
      %125 = vector.shape_cast %124 : vector<10x1xf32> to vector<10x1xf32>
      %126 = vector.broadcast %125 : vector<10x1xf32> to vector<10x128xf32>
      %c0_68 = arith.constant 0 : index
      %c0_69 = arith.constant 0 : index
      %127 = vector.load %arg3[%c0_68, %c0_69] : memref<10x128xf32, #tpu.memory_space<vmem>>, vector<10x128xf32>
      tpu.vector_store %arg3[%c0_68, %c0_69], %126 {strides = array<i32>} : memref<10x128xf32, #tpu.memory_space<vmem>>, vector<10x128xf32>,
    } else {
    }
    return
  }
  func.func @transform_0(%arg0: i32) -> (i32, i32, i32) {
    %c0_i32 = arith.constant 0 : i32
    %c0_i32_0 = arith.constant 0 : i32
    %c0_i32_1 = arith.constant 0 : i32
    return %c0_i32, %arg0, %c0_i32_0 : i32, i32, i32
  }
  func.func @transform_1(%arg0: i32) -> (i32, i32, i32) {
    %c0_i32 = arith.constant 0 : i32
    %c0_i32_0 = arith.constant 0 : i32
    %c0_i32_1 = arith.constant 0 : i32
    return %c0_i32, %arg0, %c0_i32_0 : i32, i32, i32
  }
  func.func @transform_2(%arg0: i32) -> (i32, i32) {
    %c0_i32 = arith.constant 0 : i32
    %c0_i32_0 = arith.constant 0 : i32
    %c0_i32_1 = arith.constant 0 : i32
    return %c0_i32, %c0_i32_0 : i32, i32
  }
}

</mosaic_0001>

<llo_original>
// kernel: loss_forward.1
$region0: #{loss_forward.1}
  #allocation0 [shape = 'u32[]', space=smem, size = 0x4, offset = 0x4, fixed_abs, tag = 'smem constant byte address 0x4 - core index']
  #allocation1 [shape = 'u32[72,128]{1,0:T(1,128)}', space=vmem, size = 0x9000, scoped, tag = 'internal scratch']
  #allocation2 [shape = 'f32[10,16,128]{2,1,0:T(8,128)}', space=vmem, size = 0x14000, scoped, tag = 'scratch operand']
  %s0 = inlined_call_operand.vmem [shape: f32[5,16,128], index: 0, kind: input, shape index: {}]
  %s1 = inlined_call_operand.vmem [shape: f32[5,16,128], index: 1, kind: input, shape index: {}]
  %s2 = inlined_call_operand.vmem [shape: f32[10,128], index: 2, kind: output, shape index: {}]
  %s3 = sld [smem:[#allocation0]]
  $region26: #{loss_forward.1} parent=0
    _
  %s5 = ssub.s32 1, %s3
  %s6 = scalar_select 0, %s5, %s3
  // Predicated region
  $region2: #{loss_forward.1} parent=0 // pred_check
    _
  $region3: #{loss_forward.1} parent=0 // pred_check_branch
    %8 = sbr.rel (0) target = $region5
  $region4: #{loss_forward.1} parent=0 // pred_region
    _
  $region5: #{loss_forward.1} parent=0 // pred_fallthru
    _
  // Predicated region
  $region6: #{loss_forward.1} parent=0 // pred_check
    _
  $region7: #{loss_forward.1} parent=0 // pred_check_branch
    %10 = sbr.rel (0) target = $region9
  $region8: #{loss_forward.1} parent=0 // pred_region
    _
  $region9: #{loss_forward.1} parent=0 // pred_fallthru
    _
  %p11 = scmp.eq.s32.totalorder 0, 0
  // Predicated region
  $region10: #{loss_forward.1} parent=0 // pred_check
    %p12 = pneg %p11
  $region11: #{loss_forward.1} parent=0 // pred_check_branch
    %14 = sbr.rel (%p12) target = $region13
  $region12: #{loss_forward.1} parent=0 // pred_region
    %15 = vst [vmem:[#allocation2] sm:$0xff] 0.0
    %16 = vst [vmem:[#allocation2 + $0x8] sm:$0xff] 0.0
    %17 = vst [vmem:[#allocation2 + $0x10] sm:$0xff] 0.0
    %18 = vst [vmem:[#allocation2 + $0x18] sm:$0xff] 0.0
    %19 = vst [vmem:[#allocation2 + $0x20] sm:$0xff] 0.0
    %20 = vst [vmem:[#allocation2 + $0x28] sm:$0xff] 0.0
    %21 = vst [vmem:[#allocation2 + $0x30] sm:$0xff] 0.0
    %22 = vst [vmem:[#allocation2 + $0x38] sm:$0xff] 0.0
    %23 = vst [vmem:[#allocation2 + $0x40] sm:$0xff] 0.0
    %24 = vst [vmem:[#allocation2 + $0x48] sm:$0xff] 0.0
    %25 = vst [vmem:[#allocation2 + $0x50] sm:$0xff] 0.0
    %26 = vst [vmem:[#allocation2 + $0x58] sm:$0xff] 0.0
    %27 = vst [vmem:[#allocation2 + $0x60] sm:$0xff] 0.0
    %28 = vst [vmem:[#allocation2 + $0x68] sm:$0xff] 0.0
    %29 = vst [vmem:[#allocation2 + $0x70] sm:$0xff] 0.0
    %30 = vst [vmem:[#allocation2 + $0x78] sm:$0xff] 0.0
    %31 = vst [vmem:[#allocation2 + $0x80] sm:$0xff] 0.0
    %32 = vst [vmem:[#allocation2 + $0x88] sm:$0xff] 0.0
    %33 = vst [vmem:[#allocation2 + $0x90] sm:$0xff] 0.0
    %34 = vst [vmem:[#allocation2 + $0x98] sm:$0xff] 0.0
  $region13: #{loss_forward.1} parent=0 // pred_fallthru
    _
  %v35 = vld [vmem:[%s0] sm:$0xff]
  %v36 = vld [vmem:[%s0 + $0x8] sm:$0xff]
  %v37 = vld [vmem:[%s0 + $0x10] sm:$0xff]
  %v38 = vld [vmem:[%s0 + $0x18] sm:$0xff]
  %v39 = vld [vmem:[%s0 + $0x20] sm:$0xff]
  %v40 = vld [vmem:[%s0 + $0x28] sm:$0xff]
  %v41 = vld [vmem:[%s0 + $0x30] sm:$0xff]
  %v42 = vld [vmem:[%s0 + $0x38] sm:$0xff]
  %v43 = vld [vmem:[%s0 + $0x40] sm:$0xff]
  %v44 = vld [vmem:[%s0 + $0x48] sm:$0xff]
  %v45 = vld [vmem:[%s1] sm:$0xff]
  %v46 = vld [vmem:[%s1 + $0x8] sm:$0xff]
  %v47 = vld [vmem:[%s1 + $0x10] sm:$0xff]
  %v48 = vld [vmem:[%s1 + $0x18] sm:$0xff]
  %v49 = vld [vmem:[%s1 + $0x20] sm:$0xff]
  %v50 = vld [vmem:[%s1 + $0x28] sm:$0xff]
  %v51 = vld [vmem:[%s1 + $0x30] sm:$0xff]
  %v52 = vld [vmem:[%s1 + $0x38] sm:$0xff]
  %v53 = vld [vmem:[%s1 + $0x40] sm:$0xff]
  %v54 = vld [vmem:[%s1 + $0x48] sm:$0xff]
  %vm55 = vcmp.gt.f32.partialorder %v45, 0.5
  %vm56 = vcmp.gt.f32.partialorder %v46, 0.5
  %v57 = vsel %vm55, 1, 0
  %v58 = vsel %vm56, 1, 0
  %v59 = vcvt.s32.f32 %v57
  %v60 = vcvt.s32.f32 %v58
  %vm61 = vcmp.lt.f32.partialorder %v45, -0.5
  %vm62 = vcmp.lt.f32.partialorder %v46, -0.5
  %v63 = vsel %vm61, 1, 0
  %v64 = vsel %vm62, 1, 0
  %v65 = vcvt.s32.f32 %v63
  %v66 = vcvt.s32.f32 %v64
  %v67 = vand.u32 2147483647, %v35
  %v68 = vand.u32 2147483647, %v36
  %v69 = vsub.f32 0.0, %v67
  %v70 = vsub.f32 0.0, %v68
  %v71 = vmul.f32 %v69, 1.442695
  %v72 = vpow.pop %v71
  %v73 = vmul.f32 %v70, 1.442695
  %v74 = vpow.pop %v73
  %v75 = vadd.f32 %v72, 1.0
  %v76 = vlog2.pop %v75
  %v77 = vmul.f32 %v76, 0.6931472
  %v78 = vmul.f32 -0.5, %v72
  %v79 = vadd.f32 %v78, 1.0
  %v80 = vmul.f32 %v79, %v72
  %v81 = vand.u32 2147483647, %v72
  %vm82 = vcmp.lt.f32.partialorder %v81, 0.0004427343
  %v83 = vsel %vm82, %v80, %v77
  %v84 = vadd.f32 %v74, 1.0
  %v85 = vlog2.pop %v84
  %v86 = vmul.f32 %v85, 0.6931472
  %v87 = vmul.f32 -0.5, %v74
  %v88 = vadd.f32 %v87, 1.0
  %v89 = vmul.f32 %v88, %v74
  %v90 = vand.u32 2147483647, %v74
  %vm91 = vcmp.lt.f32.partialorder %v90, 0.0004427343
  %v92 = vsel %vm91, %v89, %v86
  %v93 = vsub.f32 0.0, %v35
  %v94 = vsub.f32 0.0, %v36
  %v95 = vmax.f32 %v93, 0.0
  %v96 = vmax.f32 %v94, 0.0
  %v97 = vadd.f32 %v95, %v83
  %v98 = vadd.f32 %v96, %v92
  %v99 = vmin.f32 %v97, 100.0
  %v100 = vmin.f32 %v98, 100.0
  %v101 = vsub.f32 0.0, %v99
  %v102 = vsub.f32 0.0, %v100
  %v103 = vmax.f32 %v35, 0.0
  %v104 = vmax.f32 %v36, 0.0
  %v105 = vadd.f32 %v103, %v83
  %v106 = vadd.f32 %v104, %v92
  %v107 = vmin.f32 %v105, 100.0
  %v108 = vmin.f32 %v106, 100.0
  %v109 = vsub.f32 0.0, %v107
  %v110 = vsub.f32 0.0, %v108
  %v111 = vmul.f32 %v45, %v101
  %v112 = vmul.f32 %v46, %v102
  %v113 = vsub.f32 1.0, %v45
  %v114 = vsub.f32 1.0, %v46
  %v115 = vmul.f32 %v113, %v109
  %v116 = vmul.f32 %v114, %v110
  %v117 = vadd.f32 %v111, %v115
  %v118 = vadd.f32 %v112, %v116
  %v119 = vsub.f32 0.0, %v117
  %v120 = vsub.f32 0.0, %v118
  %v121 = vadd.f32 %v45, 1.0
  %v122 = vadd.f32 %v46, 1.0
  %v123 = vmul.f32 %v121, %v101
  %v124 = vmul.f32 %v122, %v102
  %v125 = vsub.f32 1.0, %v121
  %v126 = vsub.f32 1.0, %v122
  %v127 = vmul.f32 %v125, %v109
  %v128 = vmul.f32 %v126, %v110
  %v129 = vadd.f32 %v123, %v127
  %v130 = vadd.f32 %v124, %v128
  %v131 = vsub.f32 0.0, %v129
  %v132 = vsub.f32 0.0, %v130
  %v133 = vsub.f32 %v37, %v47
  %v134 = vsub.f32 %v38, %v48
  %v135 = vsub.f32 %v39, %v49
  %v136 = vsub.f32 %v40, %v50
  %v137 = vsub.f32 %v41, %v51
  %v138 = vsub.f32 %v42, %v52
  %v139 = vsub.f32 %v43, %v53
  %v140 = vsub.f32 %v44, %v54
  %v141 = vand.u32 2147483647, %v133
  %v142 = vand.u32 2147483647, %v134
  %v143 = vand.u32 2147483647, %v135
  %v144 = vand.u32 2147483647, %v136
  %v145 = vand.u32 2147483647, %v137
  %v146 = vand.u32 2147483647, %v138
  %v147 = vand.u32 2147483647, %v139
  %v148 = vand.u32 2147483647, %v140
  %vm149 = vcmp.lt.f32.partialorder %v141, 1.0
  %vm150 = vcmp.lt.f32.partialorder %v142, 1.0
  %vm151 = vcmp.lt.f32.partialorder %v143, 1.0
  %vm152 = vcmp.lt.f32.partialorder %v144, 1.0
  %vm153 = vcmp.lt.f32.partialorder %v145, 1.0
  %vm154 = vcmp.lt.f32.partialorder %v146, 1.0
  %vm155 = vcmp.lt.f32.partialorder %v147, 1.0
  %vm156 = vcmp.lt.f32.partialorder %v148, 1.0
  %v157 = vmul.f32 %v133, 0.5
  %v158 = vmul.f32 %v134, 0.5
  %v159 = vmul.f32 %v135, 0.5
  %v160 = vmul.f32 %v136, 0.5
  %v161 = vmul.f32 %v137, 0.5
  %v162 = vmul.f32 %v138, 0.5
  %v163 = vmul.f32 %v139, 0.5
  %v164 = vmul.f32 %v140, 0.5
  %v165 = vmul.f32 %v157, %v133
  %v166 = vmul.f32 %v158, %v134
  %v167 = vmul.f32 %v159, %v135
  %v168 = vmul.f32 %v160, %v136
  %v169 = vmul.f32 %v161, %v137
  %v170 = vmul.f32 %v162, %v138
  %v171 = vmul.f32 %v163, %v139
  %v172 = vmul.f32 %v164, %v140
  %v173 = vsub.f32 %v141, 0.5
  %v174 = vsub.f32 %v142, 0.5
  %v175 = vsub.f32 %v143, 0.5
  %v176 = vsub.f32 %v144, 0.5
  %v177 = vsub.f32 %v145, 0.5
  %v178 = vsub.f32 %v146, 0.5
  %v179 = vsub.f32 %v147, 0.5
  %v180 = vsub.f32 %v148, 0.5
  %v181 = vsel %vm149, %v165, %v173
  %v182 = vsel %vm150, %v166, %v174
  %v183 = vsel %vm151, %v167, %v175
  %v184 = vsel %vm152, %v168, %v176
  %v185 = vsel %vm153, %v169, %v177
  %v186 = vsel %vm154, %v170, %v178
  %v187 = vsel %vm155, %v171, %v179
  %v188 = vsel %vm156, %v172, %v180
  %v189 = vmul.f32 %v181, %v59
  %v190 = vmul.f32 %v182, %v60
  %v191 = vmul.f32 %v183, %v59
  %v192 = vmul.f32 %v184, %v60
  %v193 = vmul.f32 %v185, %v59
  %v194 = vmul.f32 %v186, %v60
  %v195 = vmul.f32 %v187, %v59
  %v196 = vmul.f32 %v188, %v60
  %vm197 = vcmp.ge.f32.partialorder %v35, 0.0
  %vm198 = vcmp.ge.f32.partialorder %v36, 0.0
  %v199 = vsel %vm197, 1, 0
  %v200 = vsel %vm198, 1, 0
  %v201 = vcvt.s32.f32 %v199
  %v202 = vcvt.s32.f32 %v200
  %v203 = vld [vmem:[#allocation2] sm:$0xff]
  %v204 = vld [vmem:[#allocation2 + $0x8] sm:$0xff]
  %v205 = vmul.f32 %v119, %v59
  %v206 = vmul.f32 %v120, %v60
  %v207 = vadd.f32 %v203, %v205
  %v208 = vadd.f32 %v204, %v206
  %209 = vst [vmem:[#allocation2] sm:$0xff] %v207
  %210 = vst [vmem:[#allocation2 + $0x8] sm:$0xff] %v208
  %s211 = scalar_lea.vmem [#allocation2], 16
  %v212 = vld [vmem:[%s211] sm:$0xff]
  %v213 = vld [vmem:[%s211 + $0x8] sm:$0xff]
  %v214 = vmul.f32 %v131, %v65
  %v215 = vmul.f32 %v132, %v66
  %v216 = vadd.f32 %v212, %v214
  %v217 = vadd.f32 %v213, %v215
  %218 = vst [vmem:[%s211] sm:$0xff] %v216
  %219 = vst [vmem:[%s211 + $0x8] sm:$0xff] %v217
  %s220 = scalar_lea.vmem [#allocation2], 32
  %v221 = vld [vmem:[%s220] sm:$0xff]
  %v222 = vld [vmem:[%s220 + $0x8] sm:$0xff]
  %v223 = vld [vmem:[%s220 + $0x10] sm:$0xff]
  %v224 = vld [vmem:[%s220 + $0x18] sm:$0xff]
  %v225 = vld [vmem:[%s220 + $0x20] sm:$0xff]
  %v226 = vld [vmem:[%s220 + $0x28] sm:$0xff]
  %v227 = vld [vmem:[%s220 + $0x30] sm:$0xff]
  %v228 = vld [vmem:[%s220 + $0x38] sm:$0xff]
  %v229 = vadd.f32 %v221, %v189
  %v230 = vadd.f32 %v222, %v190
  %v231 = vadd.f32 %v223, %v191
  %v232 = vadd.f32 %v224, %v192
  %v233 = vadd.f32 %v225, %v193
  %v234 = vadd.f32 %v226, %v194
  %v235 = vadd.f32 %v227, %v195
  %v236 = vadd.f32 %v228, %v196
  %237 = vst [vmem:[%s220] sm:$0xff] %v229
  %238 = vst [vmem:[%s220 + $0x8] sm:$0xff] %v230
  %239 = vst [vmem:[%s220 + $0x10] sm:$0xff] %v231
  %240 = vst [vmem:[%s220 + $0x18] sm:$0xff] %v232
  %241 = vst [vmem:[%s220 + $0x20] sm:$0xff] %v233
  %242 = vst [vmem:[%s220 + $0x28] sm:$0xff] %v234
  %243 = vst [vmem:[%s220 + $0x30] sm:$0xff] %v235
  %244 = vst [vmem:[%s220 + $0x38] sm:$0xff] %v236
  %s245 = scalar_lea.vmem [#allocation2], 96
  %v246 = vld [vmem:[%s245] sm:$0xff]
  %v247 = vld [vmem:[%s245 + $0x8] sm:$0xff]
  %v248 = vadd.f32 %v246, %v59
  %v249 = vadd.f32 %v247, %v60
  %250 = vst [vmem:[%s245] sm:$0xff] %v248
  %251 = vst [vmem:[%s245 + $0x8] sm:$0xff] %v249
  %s252 = scalar_lea.vmem [#allocation2], 112
  %v253 = vld [vmem:[%s252] sm:$0xff]
  %v254 = vld [vmem:[%s252 + $0x8] sm:$0xff]
  %v255 = vadd.f32 %v253, %v65
  %v256 = vadd.f32 %v254, %v66
  %257 = vst [vmem:[%s252] sm:$0xff] %v255
  %258 = vst [vmem:[%s252 + $0x8] sm:$0xff] %v256
  %s259 = scalar_lea.vmem [#allocation2], 128
  %v260 = vld [vmem:[%s259] sm:$0xff]
  %v261 = vld [vmem:[%s259 + $0x8] sm:$0xff]
  %v262 = vmul.f32 %v201, %v59
  %v263 = vmul.f32 %v202, %v60
  %v264 = vadd.f32 %v260, %v262
  %v265 = vadd.f32 %v261, %v263
  %266 = vst [vmem:[%s259] sm:$0xff] %v264
  %267 = vst [vmem:[%s259 + $0x8] sm:$0xff] %v265
  %s268 = scalar_lea.vmem [#allocation2], 144
  %v269 = vld [vmem:[%s268] sm:$0xff]
  %v270 = vld [vmem:[%s268 + $0x8] sm:$0xff]
  %v271 = vsub.f32 1.0, %v201
  %v272 = vsub.f32 1.0, %v202
  %v273 = vmul.f32 %v271, %v65
  %v274 = vmul.f32 %v272, %v66
  %v275 = vadd.f32 %v269, %v273
  %v276 = vadd.f32 %v270, %v274
  %277 = vst [vmem:[%s268] sm:$0xff] %v275
  %278 = vst [vmem:[%s268 + $0x8] sm:$0xff] %v276
  // Predicated region
  $region14: #{loss_forward.1} parent=0 // pred_check
    %p279 = pneg %p11
  $region15: #{loss_forward.1} parent=0 // pred_check_branch
    %281 = sbr.rel (%p279) target = $region17
  $region16: #{loss_forward.1} parent=0 // pred_region
    %v282 = vld [vmem:[#allocation2] sm:$0xff]
    %v283 = vld [vmem:[#allocation2 + $0x8] sm:$0xff]
    %v284 = vld [vmem:[#allocation2 + $0x10] sm:$0xff]
    %v285 = vld [vmem:[#allocation2 + $0x18] sm:$0xff]
    %v286 = vld [vmem:[#allocation2 + $0x20] sm:$0xff]
    %v287 = vld [vmem:[#allocation2 + $0x28] sm:$0xff]
    %v288 = vld [vmem:[#allocation2 + $0x30] sm:$0xff]
    %v289 = vld [vmem:[#allocation2 + $0x38] sm:$0xff]
    %v290 = vld [vmem:[#allocation2 + $0x40] sm:$0xff]
    %v291 = vld [vmem:[#allocation2 + $0x48] sm:$0xff]
    %v292 = vld [vmem:[#allocation2 + $0x50] sm:$0xff]
    %v293 = vld [vmem:[#allocation2 + $0x58] sm:$0xff]
    %v294 = vld [vmem:[#allocation2 + $0x60] sm:$0xff]
    %v295 = vld [vmem:[#allocation2 + $0x68] sm:$0xff]
    %v296 = vld [vmem:[#allocation2 + $0x70] sm:$0xff]
    %v297 = vld [vmem:[#allocation2 + $0x78] sm:$0xff]
    %v298 = vld [vmem:[#allocation2 + $0x80] sm:$0xff]
    %v299 = vld [vmem:[#allocation2 + $0x88] sm:$0xff]
    %v300 = vld [vmem:[#allocation2 + $0x90] sm:$0xff]
    %v301 = vld [vmem:[#allocation2 + $0x98] sm:$0xff]
    %v302 = vadd.f32 %v282, %v283
    %v303 = vrot.slane %v302, 4
    %v304 = vadd.f32 %v302, %v303
    %v305 = vrot.slane %v304, 2
    %v306 = vadd.f32 %v304, %v305
    %v307 = vrot.slane %v306, 1
    %v308 = vadd.f32 %v306, %v307
    %v309 = vadd.f32 %v284, %v285
    %v310 = vrot.slane %v309, 4
    %v311 = vadd.f32 %v309, %v310
    %v312 = vrot.slane %v311, 2
    %v313 = vadd.f32 %v311, %v312
    %v314 = vrot.slane %v313, 1
    %v315 = vadd.f32 %v313, %v314
    %v316 = vadd.f32 %v286, %v287
    %v317 = vrot.slane %v316, 4
    %v318 = vadd.f32 %v316, %v317
    %v319 = vrot.slane %v318, 2
    %v320 = vadd.f32 %v318, %v319
    %v321 = vrot.slane %v320, 1
    %v322 = vadd.f32 %v320, %v321
    %v323 = vadd.f32 %v288, %v289
    %v324 = vrot.slane %v323, 4
    %v325 = vadd.f32 %v323, %v324
    %v326 = vrot.slane %v325, 2
    %v327 = vadd.f32 %v325, %v326
    %v328 = vrot.slane %v327, 1
    %v329 = vadd.f32 %v327, %v328
    %v330 = vadd.f32 %v290, %v291
    %v331 = vrot.slane %v330, 4
    %v332 = vadd.f32 %v330, %v331
    %v333 = vrot.slane %v332, 2
    %v334 = vadd.f32 %v332, %v333
    %v335 = vrot.slane %v334, 1
    %v336 = vadd.f32 %v334, %v335
    %v337 = vadd.f32 %v292, %v293
    %v338 = vrot.slane %v337, 4
    %v339 = vadd.f32 %v337, %v338
    %v340 = vrot.slane %v339, 2
    %v341 = vadd.f32 %v339, %v340
    %v342 = vrot.slane %v341, 1
    %v343 = vadd.f32 %v341, %v342
    %v344 = vadd.f32 %v294, %v295
    %v345 = vrot.slane %v344, 4
    %v346 = vadd.f32 %v344, %v345
    %v347 = vrot.slane %v346, 2
    %v348 = vadd.f32 %v346, %v347
    %v349 = vrot.slane %v348, 1
    %v350 = vadd.f32 %v348, %v349
    %v351 = vadd.f32 %v296, %v297
    %v352 = vrot.slane %v351, 4
    %v353 = vadd.f32 %v351, %v352
    %v354 = vrot.slane %v353, 2
    %v355 = vadd.f32 %v353, %v354
    %v356 = vrot.slane %v355, 1
    %v357 = vadd.f32 %v355, %v356
    %v358 = vadd.f32 %v298, %v299
    %v359 = vrot.slane %v358, 4
    %v360 = vadd.f32 %v358, %v359
    %v361 = vrot.slane %v360, 2
    %v362 = vadd.f32 %v360, %v361
    %v363 = vrot.slane %v362, 1
    %v364 = vadd.f32 %v362, %v363
    %v365 = vadd.f32 %v300, %v301
    %v366 = vrot.slane %v365, 4
    %v367 = vadd.f32 %v365, %v366
    %v368 = vrot.slane %v367, 2
    %v369 = vadd.f32 %v367, %v368
    %v370 = vrot.slane %v369, 1
    %v371 = vadd.f32 %v369, %v370
    %vm382 = vcmask 1041409
    %v383 = vsel %vm382, %v315, %v308
    %vm384 = vcmask 1042434
    %v385 = vsel %vm384, %v322, %v383
    %vm386 = vcmask 1043459
    %v387 = vsel %vm386, %v329, %v385
    %vm388 = vcmask 1044484
    %v389 = vsel %vm388, %v336, %v387
    %vm390 = vcmask 1045509
    %v391 = vsel %vm390, %v343, %v389
    %vm392 = vcmask 1046534
    %v393 = vsel %vm392, %v350, %v391
    %vm394 = vcmask 1047559
    %v395 = vsel %vm394, %v357, %v393
    %v396 = vsel %vm382, %v371, %v364
    %399 = vadd.xlane.f32.xlu0 %v395
    %v400 = vpop.xlane.xlu0 %399
    %vm401 = vcmask 1041408
    %v402 = vsel %vm401, %v396, 0.0
    %403 = vadd.xlane.f32.xlu0 %v402
    %v404 = vpop.xlane.xlu0 %403
    %405 = vst [vmem:[%s2] sm:$0xff] %v400
    %406 = vst [vmem:[%s2 + $0x8] sm:$0x3] %v404
  $region17: #{loss_forward.1} parent=0 // pred_fallthru
    _
  // Predicated region
  $region18: #{loss_forward.1} parent=0 // pred_check
    _
  $region19: #{loss_forward.1} parent=0 // pred_check_branch
    %408 = sbr.rel (0) target = $region21
  $region20: #{loss_forward.1} parent=0 // pred_region
    _
  $region21: #{loss_forward.1} parent=0 // pred_fallthru
    _
  // Predicated region
  $region22: #{loss_forward.1} parent=0 // pred_check
    _
  $region23: #{loss_forward.1} parent=0 // pred_check_branch
    %410 = sbr.rel (0) target = $region25
  $region24: #{loss_forward.1} parent=0 // pred_region
    _
  $region25: #{loss_forward.1} parent=0 // pred_fallthru
    _

</llo_original>
